<compile_context>
chip_gen: v5e
topology: v5e:2x2
jax: 0.10.0
libtpu: 0.0.40
codegen_flags: <defaults>
</compile_context>

<pallas_src>
import jax
import jax.numpy as jnp
from jax.experimental import pallas as pl
from jax.experimental.pallas import tpu as pltpu


def _round_up(x, m):
    return (x + m - 1) // m * m


def _cdiv(a, b):
    return (a + b - 1) // b


def _make_kernel(B, D, block_b, tile_d):
    def kernel(p_ref, t_ref, w_ref, out_ref):
        i = pl.program_id(0)   # batch-tile index ("parallel")
        d = pl.program_id(1)   # D-tile index ("arbitrary" reduction axis)

        # Output block is resident across the d axis -> zero it on the first
        # d step and accumulate afterwards.
        @pl.when(d == 0)
        def _():
            out_ref[...] = jnp.zeros_like(out_ref)

        p = p_ref[...].astype(jnp.float32)
        t = t_ref[...].astype(jnp.float32)
        diff = p - t
        sq = diff * diff  # WeightedL2 elementwise loss
        # TODO(synk): use jnp.abs(diff) here for the WeightedL1 subclass.

        # Mask rows past the true batch size and columns past the true D:
        # Pallas' implicit padding of partial last blocks is unspecified data.
        row = jax.lax.broadcasted_iota(jnp.int32, sq.shape, 0) + i * block_b
        col = jax.lax.broadcasted_iota(jnp.int32, sq.shape, 1) + d * tile_d
        valid = (row < B) & (col < D)
        sq = jnp.where(valid, sq, 0.0)

        # Both statistics are column-weighted sums of sq, so reduce the rows
        # once (sublane reduce), then two cheap (1, tile_d) lane reductions.
        col_sq = jnp.sum(sq, axis=0, keepdims=True)  # (1, tile_d)

        # w_ref: (2, tile_d) f32 constant; row 0 = weights, row 1 = masked
        # 1/weights[0, :action_dim] (zeros elsewhere). Precomputed in wrapper.
        wsum = jnp.sum(col_sq * w_ref[0:1, :])
        a0_sum = jnp.sum(col_sq * w_ref[1:2, :])

        # Accumulate the two partial sums into lanes (0, 1) of row 0 of this
        # batch-tile's output block; everything else stays zero.
        sub = jax.lax.broadcasted_iota(jnp.int32, out_ref.shape, 0)
        lane = jax.lax.broadcasted_iota(jnp.int32, out_ref.shape, 1)
        first_row = sub == 0
        out_ref[...] = (
            out_ref[...]
            + jnp.where(first_row & (lane == 0), wsum, 0.0)
            + jnp.where(first_row & (lane == 1), a0_sum, 0.0)
        )

    return kernel


def _choose_tiles(B, D, itemsize, target_block_bytes):
    # 16 rows satisfies both f32 (8,128) and bf16 (16,128) minimum tiles.
    row_mult = 16
    if D * row_mult * itemsize <= target_block_bytes:
        # Full-width tile; spend the budget on batch rows.
        tile_d = D
        rows = target_block_bytes // (D * itemsize)
        block_b = max(row_mult, rows // row_mult * row_mult)
    else:
        # Wide D: tile the lane axis in multiples of 128 and keep rows minimal.
        tile_d = max(128, (target_block_bytes // (row_mult * itemsize)) // 128 * 128)
        block_b = row_mult

    # Never exceed the (rounded-up) batch.
    block_b = min(block_b, _round_up(B, row_mult))
    # v7x: keep >= 2 batch steps so both TensorCores get work on the
    # "parallel" batch axis (no effect on v5e/v6e: grid is just a loop there).
    if B > row_mult and _cdiv(B, block_b) < 2:
        block_b = _round_up(_cdiv(B, 2), row_mult)

    n_b = _cdiv(B, block_b)
    n_d = _cdiv(D, tile_d)
    return block_b, tile_d, n_b, n_d


def weighted_loss(pred, targ, weights, action_dim, *, target_block_bytes=4 * 1024 * 1024):
    """Mirrors WeightedLoss.forward (WeightedL2 variant). Returns (loss, info)."""
    B, H, T = pred.shape
    assert targ.shape == (B, H, T)
    assert weights.shape == (H, T)
    # Flat columns [0, action_dim) == loss[:, 0, :action_dim] only if this holds.
    assert action_dim <= T, "action_dim must be <= transition_dim"
    D = H * T

    # Lane-dense layout: flatten (H, T) -> D so the last (lane) dim is wide.
    # NO dtype upcast and NO padding here -> no extra HBM traffic.
    p2 = pred.reshape(B, D)
    t2 = targ.reshape(B, D)
    itemsize = jnp.dtype(p2.dtype).itemsize

    block_b, tile_d, n_b, n_d = _choose_tiles(B, D, itemsize, target_block_bytes)

    # One-time tiny constant: row 0 = weights, row 1 = masked 1/weights for the
    # a0 slice. Hoisted out of the kernel (loop-invariant).
    w_flat = weights.reshape(D).astype(jnp.float32)
    a0_cols = jnp.arange(D) < action_dim
    inv_w0 = jnp.where(a0_cols, 1.0 / jnp.where(a0_cols, w_flat, 1.0), 0.0)
    w_stack = jnp.stack([w_flat, inv_w0], axis=0)  # (2, D), f32
    Dp = n_d * tile_d
    if Dp != D:
        # Cheap: this is a tiny (2, D) constant, not the big inputs.
        w_stack = jnp.pad(w_stack, ((0, 0), (0, Dp - D)))

    # 2 inputs x 2 pipeline buffers x block, plus slack; clamped so it compiles
    # on v5e (16 MiB scoped default) and stays well under v7x's 64 MiB physical.
    block_bytes = block_b * tile_d * itemsize
    vmem_limit = int(min(48 * 1024 * 1024,
                         max(16 * 1024 * 1024, 4 * block_bytes + 2 * 1024 * 1024)))

    partials = pl.pallas_call(
        _make_kernel(B, D, block_b, tile_d),
        out_shape=jax.ShapeDtypeStruct((n_b * 8, 128), jnp.float32),
        grid_spec=pltpu.PrefetchScalarGridSpec(
            num_scalar_prefetch=0,
            grid=(n_b, n_d),
            in_specs=[
                # TODO(synk): pipeline_mode=pl.Buffered(3) here if a trace shows
                # exposed DMA at step boundaries (small D / very short steps).
                pl.BlockSpec((block_b, tile_d), lambda i, d: (i, d)),
                pl.BlockSpec((block_b, tile_d), lambda i, d: (i, d)),
                pl.BlockSpec((2, tile_d), lambda i, d: (0, d)),
            ],
            out_specs=pl.BlockSpec((8, 128), lambda i, d: (i, 0)),
        ),
        compiler_params=pltpu.CompilerParams(
            dimension_semantics=("parallel", "arbitrary"),
            vmem_limit_bytes=vmem_limit,
        ),
    )(p2, t2, w_stack)

    # Tiny final combine in plain JAX (n_b partial blocks, 2 useful lanes).
    wsum_total = jnp.sum(partials[:, 0])
    a0_total = jnp.sum(partials[:, 1])
    weighted = wsum_total * (1.0 / (B * H * T))
    a0_loss = a0_total * (1.0 / (B * action_dim))
    return weighted, {"a0_loss": a0_loss}


def _reference(pred, targ, weights, action_dim):
    loss = (pred - targ) ** 2
    weighted = jnp.mean(loss * weights)
    a0 = jnp.mean(loss[:, 0, :action_dim] / weights[0, :action_dim])
    return weighted, a0


def _run_case(key, B, H, T, action_dim, dtype, target_block_bytes, rtol, atol):
    k1, k2 = jax.random.split(key)
    pred = jax.random.normal(k1, (B, H, T), dtype=jnp.float32)
    targ = jax.random.normal(k2, (B, H, T), dtype=jnp.float32)

    # Diffuser-style weights: per-horizon discount, boosted first-step actions.
    discounts = 0.99 ** jnp.arange(H, dtype=jnp.float32)
    weights = jnp.tile(discounts[:, None], (1, T))
    weights = weights.at[0, :action_dim].set(10.0)

    pred_c = pred.astype(dtype)
    targ_c = targ.astype(dtype)

    wl, info = weighted_loss(pred_c, targ_c, weights, action_dim,
                             target_block_bytes=target_block_bytes)
    jax.block_until_ready(wl)
    jax.block_until_ready(info["a0_loss"])

    ref_wl, ref_a0 = _reference(pred_c.astype(jnp.float32),
                                targ_c.astype(jnp.float32), weights, action_dim)
    assert jnp.allclose(wl, ref_wl, rtol=rtol, atol=atol), (B, H, T, wl, ref_wl)
    assert jnp.allclose(info["a0_loss"], ref_a0, rtol=rtol, atol=atol), \
        (B, H, T, info["a0_loss"], ref_a0)


if __name__ == "__main__":
    key = jax.random.PRNGKey(0)
    k0, k1, k2 = jax.random.split(key, 3)

    # 1) Original small shape, f32, default tile sizing (single batch block).
    _run_case(k0, B=4, H=8, T=16, action_dim=4, dtype=jnp.float32,
              target_block_bytes=4 * 1024 * 1024, rtol=1e-4, atol=1e-5)

    # 2) Non-divisible batch + bf16 inputs (no wrapper upcast, no jnp.pad):
    #    exercises the in-kernel row mask and the 2-step parallel batch grid.
    _run_case(k1, B=20, H=8, T=16, action_dim=4, dtype=jnp.bfloat16,
              target_block_bytes=4 * 1024 * 1024, rtol=2e-2, atol=2e-2)

    # 3) D not a multiple of 128 with a deliberately tiny block budget:
    #    exercises D tiling, column masking and the accumulator across the
    #    "arbitrary" reduction axis.
    _run_case(k2, B=10, H=10, T=20, action_dim=5, dtype=jnp.float32,
              target_block_bytes=8 * 1024, rtol=1e-4, atol=1e-5)

    print("KERNEL_OK")
</pallas_src>

<mosaic_0001>
module attributes {stable_mosaic.version = 11 : i64} {
  func.func @kernel(%arg0: i32, %arg1: i32, %arg2: memref<16x128xf32, #tpu.memory_space<vmem>>, %arg3: memref<16x128xf32, #tpu.memory_space<vmem>>, %arg4: memref<2x128xf32, #tpu.memory_space<vmem>>, %arg5: memref<8x128xf32, #tpu.memory_space<vmem>>) attributes {dimension_semantics = [#tpu.dimension_semantics<parallel>, #tpu.dimension_semantics<arbitrary>], iteration_bounds = array<i64: 1, 1>, scalar_prefetch = 0 : i64, scratch_operands = 0 : i64, tpu.core_type = #tpu.core_type<tc>, window_params = [{transform_indices = @transform_0, window_bounds = array<i64: 16, 128>}, {transform_indices = @transform_1, window_bounds = array<i64: 16, 128>}, {transform_indices = @transform_2, window_bounds = array<i64: 2, 128>}, {transform_indices = @transform_3, window_bounds = array<i64: 8, 128>}]} {
    %c0_i32 = arith.constant 0 : i32
    %0 = arith.cmpi eq, %arg1, %c0_i32 : i32
    %1 = arith.extui %0 : i1 to i32
    %c0_i32_0 = arith.constant 0 : i32
    %2 = arith.cmpi ne, %1, %c0_i32_0 : i32
    scf.if %2 {
      %cst_19 = arith.constant 0.000000e+00 : f32
      %56 = vector.broadcast %cst_19 : f32 to vector<8x128xf32>
      %c0_20 = arith.constant 0 : index
      %c0_21 = arith.constant 0 : index
      %57 = vector.load %arg5[%c0_20, %c0_21] : memref<8x128xf32, #tpu.memory_space<vmem>>, vector<8x128xf32>
      tpu.vector_store %arg5[%c0_20, %c0_21], %56 {strides = array<i32>} : memref<8x128xf32, #tpu.memory_space<vmem>>, vector<8x128xf32>,
    } else {
    }
    %c0 = arith.constant 0 : index
    %c0_1 = arith.constant 0 : index
    %3 = vector.load %arg2[%c0, %c0_1] : memref<16x128xf32, #tpu.memory_space<vmem>>, vector<16x128xf32>
    %c0_2 = arith.constant 0 : index
    %c0_3 = arith.constant 0 : index
    %4 = vector.load %arg3[%c0_2, %c0_3] : memref<16x128xf32, #tpu.memory_space<vmem>>, vector<16x128xf32>
    %5 = arith.subf %3, %4 : vector<16x128xf32>
    %6 = arith.mulf %5, %5 : vector<16x128xf32>
    %7 = tpu.iota {dimensions = array<i32: 0>} : vector<16x128xi32>
    %c16_i32 = arith.constant 16 : i32
    %8 = arith.muli %arg0, %c16_i32 : i32
    %9 = vector.broadcast %8 : i32 to vector<16x128xi32>
    %10 = arith.addi %7, %9 : vector<16x128xi32>
    %11 = tpu.iota {dimensions = array<i32: 1>} : vector<16x128xi32>
    %c128_i32 = arith.constant 128 : i32
    %12 = arith.muli %arg1, %c128_i32 : i32
    %13 = vector.broadcast %12 : i32 to vector<16x128xi32>
    %14 = arith.addi %11, %13 : vector<16x128xi32>
    %c4_i32 = arith.constant 4 : i32
    %15 = vector.broadcast %c4_i32 : i32 to vector<16x128xi32>
    %16 = arith.cmpi slt, %10, %15 : vector<16x128xi32>
    %c128_i32_4 = arith.constant 128 : i32
    %17 = vector.broadcast %c128_i32_4 : i32 to vector<16x128xi32>
    %18 = arith.cmpi slt, %14, %17 : vector<16x128xi32>
    %19 = arith.andi %16, %18 : vector<16x128xi1>
    %cst = arith.constant 0.000000e+00 : f32
    %20 = vector.broadcast %cst : f32 to vector<16x128xf32>
    %21 = arith.select %19, %6, %20 : vector<16x128xi1>, vector<16x128xf32>
    %cst_5 = arith.constant dense<0.000000e+00> : vector<128xf32>
    %22 = vector.multi_reduction <add>, %21, %cst_5 [0] : vector<16x128xf32> to vector<128xf32>
    %23 = vector.shape_cast %22 : vector<128xf32> to vector<1x128xf32>
    %c0_6 = arith.constant 0 : index
    %c0_7 = arith.constant 0 : index
    %24 = vector.load %arg4[%c0_6, %c0_7] : memref<2x128xf32, #tpu.memory_space<vmem>>, vector<1x128xf32>
    %25 = arith.mulf %23, %24 : vector<1x128xf32>
    %26 = vector.shape_cast %25 : vector<1x128xf32> to vector<1x1x128xf32>
    %cst_8 = arith.constant dense<0.000000e+00> : vector<1xf32>
    %27 = vector.multi_reduction <add>, %26, %cst_8 [1, 2] : vector<1x1x128xf32> to vector<1xf32>
    %28 = vector.shape_cast %27 : vector<1xf32> to vector<1x1x1xf32>
    %29 = vector.extract %28[0, 0, 0] : f32 from vector<1x1x1xf32>
    %c1 = arith.constant 1 : index
    %c0_9 = arith.constant 0 : index
    %30 = vector.load %arg4[%c1, %c0_9] : memref<2x128xf32, #tpu.memory_space<vmem>>, vector<1x128xf32>
    %31 = arith.mulf %23, %30 : vector<1x128xf32>
    %32 = vector.shape_cast %31 : vector<1x128xf32> to vector<1x1x128xf32>
    %cst_10 = arith.constant dense<0.000000e+00> : vector<1xf32>
    %33 = vector.multi_reduction <add>, %32, %cst_10 [1, 2] : vector<1x1x128xf32> to vector<1xf32>
    %34 = vector.shape_cast %33 : vector<1xf32> to vector<1x1x1xf32>
    %35 = vector.extract %34[0, 0, 0] : f32 from vector<1x1x1xf32>
    %36 = tpu.iota {dimensions = array<i32: 0>} : vector<8x128xi32>
    %37 = tpu.iota {dimensions = array<i32: 1>} : vector<8x128xi32>
    %c0_i32_11 = arith.constant 0 : i32
    %38 = vector.broadcast %c0_i32_11 : i32 to vector<8x128xi32>
    %39 = arith.cmpi eq, %36, %38 : vector<8x128xi32>
    %c0_12 = arith.constant 0 : index
    %c0_13 = arith.constant 0 : index
    %40 = vector.load %arg5[%c0_12, %c0_13] : memref<8x128xf32, #tpu.memory_space<vmem>>, vector<8x128xf32>
    %c0_i32_14 = arith.constant 0 : i32
    %41 = vector.broadcast %c0_i32_14 : i32 to vector<8x128xi32>
    %42 = arith.cmpi eq, %37, %41 : vector<8x128xi32>
    %43 = arith.andi %39, %42 : vector<8x128xi1>
    %cst_15 = arith.constant 0.000000e+00 : f32
    %44 = vector.broadcast %29 : f32 to vector<8x128xf32>
    %45 = vector.broadcast %cst_15 : f32 to vector<8x128xf32>
    %46 = arith.select %43, %44, %45 : vector<8x128xi1>, vector<8x128xf32>
    %47 = arith.addf %40, %46 : vector<8x128xf32>
    %c1_i32 = arith.constant 1 : i32
    %48 = vector.broadcast %c1_i32 : i32 to vector<8x128xi32>
    %49 = arith.cmpi eq, %37, %48 : vector<8x128xi32>
    %50 = arith.andi %39, %49 : vector<8x128xi1>
    %cst_16 = arith.constant 0.000000e+00 : f32
    %51 = vector.broadcast %35 : f32 to vector<8x128xf32>
    %52 = vector.broadcast %cst_16 : f32 to vector<8x128xf32>
    %53 = arith.select %50, %51, %52 : vector<8x128xi1>, vector<8x128xf32>
    %54 = arith.addf %47, %53 : vector<8x128xf32>
    %c0_17 = arith.constant 0 : index
    %c0_18 = arith.constant 0 : index
    %55 = vector.load %arg5[%c0_17, %c0_18] : memref<8x128xf32, #tpu.memory_space<vmem>>, vector<8x128xf32>
    tpu.vector_store %arg5[%c0_17, %c0_18], %54 {strides = array<i32>} : memref<8x128xf32, #tpu.memory_space<vmem>>, vector<8x128xf32>,
    return
  }
  func.func @transform_0(%arg0: i32, %arg1: i32) -> (i32, i32) {
    %c0_i32 = arith.constant 0 : i32
    return %arg0, %arg1 : i32, i32
  }
  func.func @transform_1(%arg0: i32, %arg1: i32) -> (i32, i32) {
    %c0_i32 = arith.constant 0 : i32
    return %arg0, %arg1 : i32, i32
  }
  func.func @transform_2(%arg0: i32, %arg1: i32) -> (i32, i32) {
    %c0_i32 = arith.constant 0 : i32
    %c0_i32_0 = arith.constant 0 : i32
    return %c0_i32, %arg1 : i32, i32
  }
  func.func @transform_3(%arg0: i32, %arg1: i32) -> (i32, i32) {
    %c0_i32 = arith.constant 0 : i32
    %c0_i32_0 = arith.constant 0 : i32
    return %arg0, %c0_i32 : i32, i32
  }
}

</mosaic_0001>

<llo_original>
// kernel: tpu_custom_call.1
$region0: #{tpu_custom_call.1}
  #allocation0 [shape = 'u32[]', space=smem, size = 0x4, offset = 0x4, fixed_abs, tag = 'smem constant byte address 0x4 - core index']
  #allocation1 [shape = 'u32[72,128]{1,0:T(1,128)}', space=vmem, size = 0x9000, scoped, tag = 'internal scratch']
  %s0 = inlined_call_operand.hbm [shape: f32[4,128], index: 0, kind: input, shape index: {}]
  %s1 = inlined_call_operand.hbm [shape: f32[4,128], index: 1, kind: input, shape index: {}]
  %s2 = inlined_call_operand.hbm [shape: f32[2,128], index: 2, kind: input, shape index: {}]
  %s3 = inlined_call_operand.hbm [shape: f32[8,128], index: 3, kind: output, shape index: {}]
  %s4 = sld [smem:[#allocation0]]
  $region38: #{tpu_custom_call.1} parent=0
    _
  %s6 = ssub.s32 1, %s4
  %s7 = scalar_select 0, %s6, %s4
  $region1: #{tpu_custom_call.1} parent=0
    #allocation2 [shape = 'u8[8192]{0}', space=vmem, size = 0x2000, scoped, tag = 'input window, operand 0, single buffered']
    #allocation3 [shape = 's32[1]{0}', space=sflag, size = 0x4, scoped, tag = 'scoped memory for tpu_custom_call.1']
    #allocation4 [shape = 's32[1]{0}', space=sflag, size = 0x4, scoped, tag = 'scoped memory for tpu_custom_call.1']
    #allocation5 [shape = 'u8[8192]{0}', space=vmem, size = 0x2000, scoped, tag = 'input window, operand 1, single buffered']
    #allocation6 [shape = 's32[1]{0}', space=sflag, size = 0x4, scoped, tag = 'scoped memory for tpu_custom_call.1']
    #allocation7 [shape = 'u8[1024]{0}', space=vmem, size = 0x400, scoped, tag = 'input window, operand 2, single buffered']
    #allocation8 [shape = 'u8[4096]{0}', space=vmem, size = 0x1000, scoped, tag = 'output window, operand 0, single buffered']
    %8 = vsyncpa [#allocation3], 0
    %9 = vsyncpa [#allocation6], 0
    %10 = vsyncpa [#allocation4], 0
    // Predicated region
    $region2: #{tpu_custom_call.1} parent=1 // pred_check
      _
    $region3: #{tpu_custom_call.1} parent=1 // pred_check_branch
      %12 = sbr.rel (0) target = $region5
    $region4: #{tpu_custom_call.1} parent=1 // pred_region
      %14 = vsyncadd [#allocation3], 192
      %s15 = sshll.u32 %s0, 4
      %s16 = int_to_ptr.hbm [resolvable:$true] %s15
      %s17 = sshll.u32 [#allocation2], 4
      %s18 = int_to_ptr.vmem [resolvable:$true] %s17
      %23 = dma.hbm_to_vmem [thread:$0]  %s16, 64, %s18, [#allocation3], 64, 64, 4
    $region5: #{tpu_custom_call.1} parent=1 // pred_fallthru
      _
    // Predicated region
    $region6: #{tpu_custom_call.1} parent=1 // pred_check
      _
    $region7: #{tpu_custom_call.1} parent=1 // pred_check_branch
      %25 = sbr.rel (0) target = $region9
    $region8: #{tpu_custom_call.1} parent=1 // pred_region
      %27 = vsyncadd [#allocation6], 192
      %s28 = sshll.u32 %s1, 4
      %s29 = int_to_ptr.hbm [resolvable:$true] %s28
      %s30 = sshll.u32 [#allocation5], 4
      %s31 = int_to_ptr.vmem [resolvable:$true] %s30
      %36 = dma.hbm_to_vmem [thread:$0]  %s29, 64, %s31, [#allocation6], 64, 64, 4
    $region9: #{tpu_custom_call.1} parent=1 // pred_fallthru
      _
    // Predicated region
    $region10: #{tpu_custom_call.1} parent=1 // pred_check
      _
    $region11: #{tpu_custom_call.1} parent=1 // pred_check_branch
      %38 = sbr.rel (0) target = $region13
    $region12: #{tpu_custom_call.1} parent=1 // pred_region
      %40 = vsyncadd [#allocation6], 0
      %s42 = sshll.u32 %s2, 4
      %s43 = int_to_ptr.hbm [resolvable:$true] %s42
      %s44 = sshll.u32 [#allocation7], 4
      %s45 = int_to_ptr.vmem [resolvable:$true] %s44
      %47 = dma.hbm_to_vmem [thread:$0]  %s43, 32, %s45, [#allocation6]
    $region13: #{tpu_custom_call.1} parent=1 // pred_fallthru
      _
    // Predicated region
    $region14: #{tpu_custom_call.1} parent=1 // pred_check
      _
    $region15: #{tpu_custom_call.1} parent=1 // pred_check_branch
      %49 = sbr.rel (0) target = $region17
    $region16: #{tpu_custom_call.1} parent=1 // pred_region
      %51 = dma.done [#allocation3], 256
    $region17: #{tpu_custom_call.1} parent=1 // pred_fallthru
      _
    // Predicated region
    $region18: #{tpu_custom_call.1} parent=1 // pred_check
      _
    $region19: #{tpu_custom_call.1} parent=1 // pred_check_branch
      %53 = sbr.rel (0) target = $region21
    $region20: #{tpu_custom_call.1} parent=1 // pred_region
      %55 = dma.done [#allocation6], 256
    $region21: #{tpu_custom_call.1} parent=1 // pred_fallthru
      _
    // Predicated region
    $region22: #{tpu_custom_call.1} parent=1 // pred_check
      _
    $region23: #{tpu_custom_call.1} parent=1 // pred_check_branch
      %57 = sbr.rel (0) target = $region25
    $region24: #{tpu_custom_call.1} parent=1 // pred_region
      %59 = dma.done [#allocation6], 32
    $region25: #{tpu_custom_call.1} parent=1 // pred_fallthru
      _
    %p60 = scmp.eq.s32.totalorder 0, 0
    // Predicated region
    $region26: #{tpu_custom_call.1} parent=1 // pred_check
      %p61 = pneg %p60
    $region27: #{tpu_custom_call.1} parent=1 // pred_check_branch
      %63 = sbr.rel (%p61) target = $region29
    $region28: #{tpu_custom_call.1} parent=1 // pred_region
      %64 = vst [vmem:[#allocation8] sm:$0xff] 0.0
    $region29: #{tpu_custom_call.1} parent=1 // pred_fallthru
      _
    %v65 = vld [vmem:[#allocation2] sm:$0xff]
    %v66 = vld [vmem:[#allocation2 + $0x8] sm:$0xff]
    %v67 = vld [vmem:[#allocation5] sm:$0xff]
    %v68 = vld [vmem:[#allocation5 + $0x8] sm:$0xff]
    %v69 = vsub.f32 %v65, %v67
    %v70 = vsub.f32 %v66, %v68
    %v71 = vmul.f32 %v69, %v69
    %v72 = vmul.f32 %v70, %v70
    %v73 = vlaneseq
    %v74 = vshrl.u32 %v73, 7
    %v75 = vadd.s32 %v74, 8
    %s76 = smul.u32 0, 16
    %v77 = vstv %s76
    %v78 = vadd.s32 %v74, %v77
    %v79 = vadd.s32 %v75, %v77
    %v80 = vlaneseq
    %v81 = vand.u32 %v80, 127
    %s82 = smul.u32 0, 128
    %v83 = vstv %s82
    %v84 = vadd.s32 %v81, %v83
    %vm85 = vcmp.lt.s32.totalorder %v78, 4
    %vm86 = vcmp.lt.s32.totalorder %v79, 4
    %vm87 = vcmp.lt.s32.totalorder %v84, 128
    %vm88 = vmand %vm85, %vm87
    %vm89 = vmand %vm86, %vm87
    %v90 = vsel %vm88, %v71, 0.0
    %v91 = vsel %vm89, %v72, 0.0
    %v92 = vadd.f32 %v90, %v91
    %v93 = vrot.slane %v92, 4
    %v94 = vadd.f32 %v92, %v93
    %v95 = vrot.slane %v94, 2
    %v96 = vadd.f32 %v94, %v95
    %v97 = vrot.slane %v96, 1
    %v98 = vadd.f32 %v96, %v97
    %v99 = vld [vmem:[#allocation7] sm:$0x1]
    %v100 = vmul.f32 %v98, %v99
    %vm101 = vcmask 1040384
    %v102 = vsel %vm101, %v100, 0.0
    %103 = vadd.xlane.f32.xlu0 %v102
    %v104 = vpop.xlane.xlu0 %103
    %v105 = vrot.slane %v104, 4
    %v106 = vadd.f32 %v104, %v105
    %v107 = vrot.slane %v106, 2
    %v108 = vadd.f32 %v106, %v107
    %v109 = vrot.slane %v108, 1
    %v110 = vadd.f32 %v108, %v109
    %s111 = vtos %v110
    %v112 = vld [vmem:[#allocation7 + $0x1] sm:$0x1]
    %v113 = vmul.f32 %v98, %v112
    %v114 = vsel %vm101, %v113, 0.0
    %115 = vadd.xlane.f32.xlu0 %v114
    %v116 = vpop.xlane.xlu0 %115
    %v117 = vrot.slane %v116, 4
    %v118 = vadd.f32 %v116, %v117
    %v119 = vrot.slane %v118, 2
    %v120 = vadd.f32 %v118, %v119
    %v121 = vrot.slane %v120, 1
    %v122 = vadd.f32 %v120, %v121
    %s123 = vtos %v122
    %vm124 = vcmp.eq.s32.totalorder %v74, 0
    %v125 = vld [vmem:[#allocation8] sm:$0xff]
    %vm126 = vcmp.eq.s32.totalorder %v81, 0
    %vm127 = vmand %vm124, %vm126
    %v128 = vstv %s111
    %v129 = vsel %vm127, %v128, 0.0
    %v130 = vadd.f32 %v125, %v129
    %vm131 = vcmp.eq.s32.totalorder %v81, 1
    %vm132 = vmand %vm124, %vm131
    %v133 = vstv %s123
    %v134 = vsel %vm132, %v133, 0.0
    %v135 = vadd.f32 %v130, %v134
    %136 = vst [vmem:[#allocation8] sm:$0xff] %v135
    // Predicated region
    $region30: #{tpu_custom_call.1} parent=1 // pred_check
      _
    $region31: #{tpu_custom_call.1} parent=1 // pred_check_branch
      %138 = sbr.rel (0) target = $region33
    $region32: #{tpu_custom_call.1} parent=1 // pred_region
      %140 = vsyncadd [#allocation4], 0
      %s142 = sshll.u32 [#allocation8], 4
      %s143 = int_to_ptr.vmem [resolvable:$true] %s142
      %s144 = sshll.u32 %s3, 4
      %s145 = int_to_ptr.hbm [resolvable:$true] %s144
      %147 = dma.vmem_to_hbm [thread:$0]  %s143, 128, %s145, [#allocation4]
    $region33: #{tpu_custom_call.1} parent=1 // pred_fallthru
      _
    // Predicated region
    $region34: #{tpu_custom_call.1} parent=1 // pred_check
      _
    $region35: #{tpu_custom_call.1} parent=1 // pred_check_branch
      %149 = sbr.rel (0) target = $region37
    $region36: #{tpu_custom_call.1} parent=1 // pred_region
      %151 = dma.done [#allocation4], 128
    $region37: #{tpu_custom_call.1} parent=1 // pred_fallthru
      _
    %152 = vsyncpa [#allocation3], 1
    %153 = vsyncpa [#allocation6], 1
    %154 = vsyncpa [#allocation4], 1

</llo_original>
